<compile_context>
chip_gen: v5e
topology: v5e:2x2
jax: 0.10.0
libtpu: 0.0.40
codegen_flags: <defaults>
</compile_context>

<pallas_src>
import functools

import jax
import jax.numpy as jnp
from jax.experimental import pallas as pl
from jax.experimental.pallas import tpu as pltpu

IGNORE_INDEX = 255
LANES = 128


def _pixelwise_ce_kernel(weights_ref, logits_ref, targets_ref, num_ref, den_ref):
    """Refs (leading batch dim squeezed):
         weights_ref : SMEM (C,)            f32
         logits_ref  : VMEM (C, TS, 128)    input dtype
         targets_ref : VMEM (TS, 128)       int32
         num_ref     : VMEM (TS, 128)       f32   (per-batch accumulator)
         den_ref     : VMEM (TS, 128)       f32   (per-batch accumulator)
    """
    p = pl.program_id(1)

    @pl.when(p == 0)
    def _():
        num_ref[...] = jnp.zeros_like(num_ref)
        den_ref[...] = jnp.zeros_like(den_ref)

    C = logits_ref.shape[0]
    t = targets_ref[...]                                # (TS, 128) int32

    # Running max over classes -- unrolled (C is static, small); pure VPU.
    m = logits_ref[0].astype(jnp.float32)               # (TS, 128)
    for c in range(1, C):
        m = jnp.maximum(m, logits_ref[c].astype(jnp.float32))

    # Single unrolled pass: sum-exp, target-logit select and target-weight
    # select fused.  ignore_index (255) and padded pixels never match any
    # class id in [0, C), so their contribution is exactly zero.
    s = jnp.zeros_like(m)
    xt_rel = jnp.zeros_like(m)                          # x_t - m  (0 if ignored)
    den_px = jnp.zeros_like(m)                          # w_t      (0 if ignored)
    for c in range(C):
        xc = logits_ref[c].astype(jnp.float32)
        s = s + jnp.exp(xc - m)                         # EUP
        sel = (t == c).astype(jnp.float32)
        xt_rel = xt_rel + sel * (xc - m)
        den_px = den_px + sel * weights_ref[c]          # scalar weight from SMEM

    # Weighted NLL per pixel: w_t * (logsumexp - x_t); zero for ignored pixels.
    num_px = den_px * (jnp.log(s) - xt_rel)             # (TS, 128)

    num_ref[...] += num_px
    den_ref[...] += den_px


@functools.partial(jax.jit, static_argnames=("tile_pixels",))
def pixelwise_cross_entropy_loss(logits_nchw, targets_b1hw, classes_weights,
                                 tile_pixels=8192):
    """logits_nchw: (B, C, H, W) float; targets_b1hw: (B, 1, H, W) int.

    tile_pixels: pixels processed per grid step (sweepable; multiple of 1024
    recommended).  Automatically clamped for tiny inputs and for VMEM (v7x has
    only 64 MiB physical VMEM, so the double-buffered logits tile is capped).
    """
    B, C, H, W = logits_nchw.shape
    P = H * W

    # ---- tile sizing --------------------------------------------------------
    s_total = -(-P // LANES)                             # 128-pixel lane groups
    itemsize = jnp.dtype(logits_nchw.dtype).itemsize
    vmem_budget = 8 * 1024 * 1024                        # double-buffered logits cap
    max_s_vmem = max(8, (vmem_budget // (2 * C * LANES * itemsize)) // 8 * 8)
    tile_s = max(8, min(tile_pixels // LANES, max_s_vmem,
                        ((s_total + 7) // 8) * 8))
    tile_s = (tile_s // 8) * 8                           # sublane multiple of 8

    s_padded = -(-s_total // tile_s) * tile_s
    Pp = s_padded * LANES

    # ---- layout glue (no transpose; reshapes are free) ----------------------
    logits = logits_nchw.reshape(B, C, P)                # keep input dtype on the wire
    targets = targets_b1hw.reshape(B, P).astype(jnp.int32)
    pad = Pp - P
    if pad:
        # Padded pixels get target=255 -> contribute exactly zero.
        logits = jnp.pad(logits, ((0, 0), (0, 0), (0, pad)))
        targets = jnp.pad(targets, ((0, 0), (0, pad)),
                          constant_values=IGNORE_INDEX)
    logits = logits.reshape(B, C, s_padded, LANES)
    targets = targets.reshape(B, s_padded, LANES)
    weights = classes_weights.astype(jnp.float32).reshape(C)

    grid = (B, s_padded // tile_s)

    num_out, den_out = pl.pallas_call(
        _pixelwise_ce_kernel,
        out_shape=(jax.ShapeDtypeStruct((B, tile_s, LANES), jnp.float32),
                   jax.ShapeDtypeStruct((B, tile_s, LANES), jnp.float32)),
        grid_spec=pltpu.PrefetchScalarGridSpec(
            num_scalar_prefetch=0,
            grid=grid,
            in_specs=[
                # class weights live in SMEM -> cheap scalar reads in the loop
                pl.BlockSpec(memory_space=pltpu.MemorySpace.SMEM),
                # logits tile: all classes x (tile_s, 128) pixels
                pl.BlockSpec((pl.Squeezed(), C, tile_s, LANES),
                             lambda b, p: (b, 0, p, 0)),
                # targets tile: lane-dense int32
                pl.BlockSpec((pl.Squeezed(), tile_s, LANES),
                             lambda b, p: (b, p, 0)),
            ],
            out_specs=[
                # per-batch vector accumulators, revisited across the pixel axis
                pl.BlockSpec((pl.Squeezed(), tile_s, LANES),
                             lambda b, p: (b, 0, 0)),
                pl.BlockSpec((pl.Squeezed(), tile_s, LANES),
                             lambda b, p: (b, 0, 0)),
            ],
        ),
        compiler_params=pltpu.CompilerParams(
            dimension_semantics=("parallel", "arbitrary")),
    )(weights, logits, targets)

    # Tiny final reduction + divide in plain JAX (keeps the grid parallelizable).
    return jnp.sum(num_out) / jnp.sum(den_out)


def _reference_loss(logits_nchw, targets_b1hw, classes_weights):
    B, C, H, W = logits_nchw.shape
    x = jnp.transpose(logits_nchw, (0, 2, 3, 1)).reshape(-1, C).astype(jnp.float32)
    t = targets_b1hw.reshape(-1).astype(jnp.int32)
    valid = (t != IGNORE_INDEX)
    t_safe = jnp.where(valid, t, 0)
    logp = jax.nn.log_softmax(x, axis=-1)
    nll = -jnp.take_along_axis(logp, t_safe[:, None], axis=-1)[:, 0]
    w = classes_weights.astype(jnp.float32)[t_safe] * valid.astype(jnp.float32)
    return jnp.sum(nll * w) / jnp.sum(w)


if __name__ == "__main__":
    key = jax.random.PRNGKey(0)
    B, C, H, W = 2, 4, 16, 16

    k1, k2, k3 = jax.random.split(key, 3)
    logits = jax.random.normal(k1, (B, C, H, W), dtype=jnp.float32)
    targets = jax.random.randint(k2, (B, 1, H, W), 0, C, dtype=jnp.int32)
    # sprinkle some ignore_index=255 pixels to exercise masking
    ignore_mask = jax.random.bernoulli(k3, 0.1, (B, 1, H, W))
    targets = jnp.where(ignore_mask, IGNORE_INDEX, targets)

    # deterministic class weights (the module's __init__ just stores them)
    classes_weights = jnp.array([1.0, 2.0, 0.5, 1.5], dtype=jnp.float32)

    loss = pixelwise_cross_entropy_loss(logits, targets, classes_weights)
    loss = jax.block_until_ready(loss)

    ref = _reference_loss(logits, targets, classes_weights)
    assert jnp.allclose(loss, ref, rtol=1e-5, atol=1e-5), (loss, ref)

    print("KERNEL_OK")
</pallas_src>

<mosaic_0001>
module attributes {stable_mosaic.version = 11 : i64} {
  func.func @_pixelwise_ce_kernel(%arg0: i32, %arg1: i32, %arg2: memref<4xf32, #tpu.memory_space<smem>>, %arg3: memref<1x4x8x128xf32, #tpu.memory_space<vmem>>, %arg4: memref<1x8x128xi32, #tpu.memory_space<vmem>>, %arg5: memref<1x8x128xf32, #tpu.memory_space<vmem>>, %arg6: memref<1x8x128xf32, #tpu.memory_space<vmem>>) attributes {dimension_semantics = [#tpu.dimension_semantics<parallel>, #tpu.dimension_semantics<arbitrary>], iteration_bounds = array<i64: 2, 1>, scalar_prefetch = 0 : i64, scratch_operands = 0 : i64, tpu.core_type = #tpu.core_type<tc>, window_params = [{transform_indices = @transform_0, window_bounds = array<i64: 4>}, {transform_indices = @transform_1, window_bounds = array<i64: 1, 4, 8, 128>}, {transform_indices = @transform_2, window_bounds = array<i64: 1, 8, 128>}, {transform_indices = @transform_3, window_bounds = array<i64: 1, 8, 128>}, {transform_indices = @transform_4, window_bounds = array<i64: 1, 8, 128>}]} {
    %c0_i32 = arith.constant 0 : i32
    %0 = arith.cmpi eq, %arg1, %c0_i32 : i32
    %1 = arith.extui %0 : i1 to i32
    %c0_i32_0 = arith.constant 0 : i32
    %2 = arith.cmpi ne, %1, %c0_i32_0 : i32
    scf.if %2 {
      %cst_51 = arith.constant 0.000000e+00 : f32
      %98 = vector.broadcast %cst_51 : f32 to vector<8x128xf32>
      %c0_52 = arith.constant 0 : index
      %c0_53 = arith.constant 0 : index
      %c0_54 = arith.constant 0 : index
      %99 = vector.load %arg5[%c0_52, %c0_53, %c0_54] : memref<1x8x128xf32, #tpu.memory_space<vmem>>, vector<1x8x128xf32>
      %100 = vector.shape_cast %99 : vector<1x8x128xf32> to vector<8x128xf32>
      %101 = vector.shape_cast %98 : vector<8x128xf32> to vector<1x8x128xf32>
      tpu.vector_store %arg5[%c0_52, %c0_53, %c0_54], %101 {strides = array<i32>} : memref<1x8x128xf32, #tpu.memory_space<vmem>>, vector<1x8x128xf32>,
      %cst_55 = arith.constant 0.000000e+00 : f32
      %102 = vector.broadcast %cst_55 : f32 to vector<8x128xf32>
      %c0_56 = arith.constant 0 : index
      %c0_57 = arith.constant 0 : index
      %c0_58 = arith.constant 0 : index
      %103 = vector.load %arg6[%c0_56, %c0_57, %c0_58] : memref<1x8x128xf32, #tpu.memory_space<vmem>>, vector<1x8x128xf32>
      %104 = vector.shape_cast %103 : vector<1x8x128xf32> to vector<8x128xf32>
      %105 = vector.shape_cast %102 : vector<8x128xf32> to vector<1x8x128xf32>
      tpu.vector_store %arg6[%c0_56, %c0_57, %c0_58], %105 {strides = array<i32>} : memref<1x8x128xf32, #tpu.memory_space<vmem>>, vector<1x8x128xf32>,
    } else {
    }
    %c0 = arith.constant 0 : index
    %c0_1 = arith.constant 0 : index
    %c0_2 = arith.constant 0 : index
    %3 = vector.load %arg4[%c0, %c0_1, %c0_2] : memref<1x8x128xi32, #tpu.memory_space<vmem>>, vector<1x8x128xi32>
    %4 = vector.shape_cast %3 : vector<1x8x128xi32> to vector<8x128xi32>
    %c0_3 = arith.constant 0 : index
    %c0_4 = arith.constant 0 : index
    %c0_5 = arith.constant 0 : index
    %c0_6 = arith.constant 0 : index
    %5 = vector.load %arg3[%c0_3, %c0_4, %c0_5, %c0_6] : memref<1x4x8x128xf32, #tpu.memory_space<vmem>>, vector<1x1x8x128xf32>
    %6 = vector.shape_cast %5 : vector<1x1x8x128xf32> to vector<8x128xf32>
    %c0_7 = arith.constant 0 : index
    %c1 = arith.constant 1 : index
    %c0_8 = arith.constant 0 : index
    %c0_9 = arith.constant 0 : index
    %7 = vector.load %arg3[%c0_7, %c1, %c0_8, %c0_9] : memref<1x4x8x128xf32, #tpu.memory_space<vmem>>, vector<1x1x8x128xf32>
    %8 = vector.shape_cast %7 : vector<1x1x8x128xf32> to vector<8x128xf32>
    %9 = arith.maximumf %6, %8 : vector<8x128xf32>
    %c0_10 = arith.constant 0 : index
    %c2 = arith.constant 2 : index
    %c0_11 = arith.constant 0 : index
    %c0_12 = arith.constant 0 : index
    %10 = vector.load %arg3[%c0_10, %c2, %c0_11, %c0_12] : memref<1x4x8x128xf32, #tpu.memory_space<vmem>>, vector<1x1x8x128xf32>
    %11 = vector.shape_cast %10 : vector<1x1x8x128xf32> to vector<8x128xf32>
    %12 = arith.maximumf %9, %11 : vector<8x128xf32>
    %c0_13 = arith.constant 0 : index
    %c3 = arith.constant 3 : index
    %c0_14 = arith.constant 0 : index
    %c0_15 = arith.constant 0 : index
    %13 = vector.load %arg3[%c0_13, %c3, %c0_14, %c0_15] : memref<1x4x8x128xf32, #tpu.memory_space<vmem>>, vector<1x1x8x128xf32>
    %14 = vector.shape_cast %13 : vector<1x1x8x128xf32> to vector<8x128xf32>
    %15 = arith.maximumf %12, %14 : vector<8x128xf32>
    %cst = arith.constant 0.000000e+00 : f32
    %16 = vector.broadcast %cst : f32 to vector<8x128xf32>
    %cst_16 = arith.constant 0.000000e+00 : f32
    %17 = vector.broadcast %cst_16 : f32 to vector<8x128xf32>
    %cst_17 = arith.constant 0.000000e+00 : f32
    %18 = vector.broadcast %cst_17 : f32 to vector<8x128xf32>
    %c0_18 = arith.constant 0 : index
    %c0_19 = arith.constant 0 : index
    %c0_20 = arith.constant 0 : index
    %c0_21 = arith.constant 0 : index
    %19 = vector.load %arg3[%c0_18, %c0_19, %c0_20, %c0_21] : memref<1x4x8x128xf32, #tpu.memory_space<vmem>>, vector<1x1x8x128xf32>
    %20 = vector.shape_cast %19 : vector<1x1x8x128xf32> to vector<8x128xf32>
    %21 = arith.subf %20, %15 : vector<8x128xf32>
    %22 = math.exp %21 : vector<8x128xf32>
    %23 = arith.addf %16, %22 : vector<8x128xf32>
    %c0_i32_22 = arith.constant 0 : i32
    %24 = vector.broadcast %c0_i32_22 : i32 to vector<8x128xi32>
    %25 = arith.cmpi eq, %4, %24 : vector<8x128xi32>
    %26 = arith.extui %25 : vector<8x128xi1> to vector<8x128xi32>
    %27 = arith.sitofp %26 : vector<8x128xi32> to vector<8x128xf32>
    %28 = arith.subf %20, %15 : vector<8x128xf32>
    %29 = arith.mulf %27, %28 : vector<8x128xf32>
    %30 = arith.addf %17, %29 : vector<8x128xf32>
    %c0_23 = arith.constant 0 : index
    %31 = memref.load %arg2[%c0_23] : memref<4xf32, #tpu.memory_space<smem>>
    %32 = vector.broadcast %31 : f32 to vector<8x128xf32>
    %33 = arith.mulf %27, %32 : vector<8x128xf32>
    %34 = arith.addf %18, %33 : vector<8x128xf32>
    %c0_24 = arith.constant 0 : index
    %c1_25 = arith.constant 1 : index
    %c0_26 = arith.constant 0 : index
    %c0_27 = arith.constant 0 : index
    %35 = vector.load %arg3[%c0_24, %c1_25, %c0_26, %c0_27] : memref<1x4x8x128xf32, #tpu.memory_space<vmem>>, vector<1x1x8x128xf32>
    %36 = vector.shape_cast %35 : vector<1x1x8x128xf32> to vector<8x128xf32>
    %37 = arith.subf %36, %15 : vector<8x128xf32>
    %38 = math.exp %37 : vector<8x128xf32>
    %39 = arith.addf %23, %38 : vector<8x128xf32>
    %c1_i32 = arith.constant 1 : i32
    %40 = vector.broadcast %c1_i32 : i32 to vector<8x128xi32>
    %41 = arith.cmpi eq, %4, %40 : vector<8x128xi32>
    %42 = arith.extui %41 : vector<8x128xi1> to vector<8x128xi32>
    %43 = arith.sitofp %42 : vector<8x128xi32> to vector<8x128xf32>
    %44 = arith.subf %36, %15 : vector<8x128xf32>
    %45 = arith.mulf %43, %44 : vector<8x128xf32>
    %46 = arith.addf %30, %45 : vector<8x128xf32>
    %c1_28 = arith.constant 1 : index
    %47 = memref.load %arg2[%c1_28] : memref<4xf32, #tpu.memory_space<smem>>
    %48 = vector.broadcast %47 : f32 to vector<8x128xf32>
    %49 = arith.mulf %43, %48 : vector<8x128xf32>
    %50 = arith.addf %34, %49 : vector<8x128xf32>
    %c0_29 = arith.constant 0 : index
    %c2_30 = arith.constant 2 : index
    %c0_31 = arith.constant 0 : index
    %c0_32 = arith.constant 0 : index
    %51 = vector.load %arg3[%c0_29, %c2_30, %c0_31, %c0_32] : memref<1x4x8x128xf32, #tpu.memory_space<vmem>>, vector<1x1x8x128xf32>
    %52 = vector.shape_cast %51 : vector<1x1x8x128xf32> to vector<8x128xf32>
    %53 = arith.subf %52, %15 : vector<8x128xf32>
    %54 = math.exp %53 : vector<8x128xf32>
    %55 = arith.addf %39, %54 : vector<8x128xf32>
    %c2_i32 = arith.constant 2 : i32
    %56 = vector.broadcast %c2_i32 : i32 to vector<8x128xi32>
    %57 = arith.cmpi eq, %4, %56 : vector<8x128xi32>
    %58 = arith.extui %57 : vector<8x128xi1> to vector<8x128xi32>
    %59 = arith.sitofp %58 : vector<8x128xi32> to vector<8x128xf32>
    %60 = arith.subf %52, %15 : vector<8x128xf32>
    %61 = arith.mulf %59, %60 : vector<8x128xf32>
    %62 = arith.addf %46, %61 : vector<8x128xf32>
    %c2_33 = arith.constant 2 : index
    %63 = memref.load %arg2[%c2_33] : memref<4xf32, #tpu.memory_space<smem>>
    %64 = vector.broadcast %63 : f32 to vector<8x128xf32>
    %65 = arith.mulf %59, %64 : vector<8x128xf32>
    %66 = arith.addf %50, %65 : vector<8x128xf32>
    %c0_34 = arith.constant 0 : index
    %c3_35 = arith.constant 3 : index
    %c0_36 = arith.constant 0 : index
    %c0_37 = arith.constant 0 : index
    %67 = vector.load %arg3[%c0_34, %c3_35, %c0_36, %c0_37] : memref<1x4x8x128xf32, #tpu.memory_space<vmem>>, vector<1x1x8x128xf32>
    %68 = vector.shape_cast %67 : vector<1x1x8x128xf32> to vector<8x128xf32>
    %69 = arith.subf %68, %15 : vector<8x128xf32>
    %70 = math.exp %69 : vector<8x128xf32>
    %71 = arith.addf %55, %70 : vector<8x128xf32>
    %c3_i32 = arith.constant 3 : i32
    %72 = vector.broadcast %c3_i32 : i32 to vector<8x128xi32>
    %73 = arith.cmpi eq, %4, %72 : vector<8x128xi32>
    %74 = arith.extui %73 : vector<8x128xi1> to vector<8x128xi32>
    %75 = arith.sitofp %74 : vector<8x128xi32> to vector<8x128xf32>
    %76 = arith.subf %68, %15 : vector<8x128xf32>
    %77 = arith.mulf %75, %76 : vector<8x128xf32>
    %78 = arith.addf %62, %77 : vector<8x128xf32>
    %c3_38 = arith.constant 3 : index
    %79 = memref.load %arg2[%c3_38] : memref<4xf32, #tpu.memory_space<smem>>
    %80 = vector.broadcast %79 : f32 to vector<8x128xf32>
    %81 = arith.mulf %75, %80 : vector<8x128xf32>
    %82 = arith.addf %66, %81 : vector<8x128xf32>
    %83 = math.log %71 : vector<8x128xf32>
    %84 = arith.subf %83, %78 : vector<8x128xf32>
    %85 = arith.mulf %82, %84 : vector<8x128xf32>
    %c0_39 = arith.constant 0 : index
    %c0_40 = arith.constant 0 : index
    %c0_41 = arith.constant 0 : index
    %86 = vector.load %arg5[%c0_39, %c0_40, %c0_41] : memref<1x8x128xf32, #tpu.memory_space<vmem>>, vector<1x8x128xf32>
    %87 = vector.shape_cast %86 : vector<1x8x128xf32> to vector<8x128xf32>
    %88 = arith.addf %87, %85 : vector<8x128xf32>
    %c0_42 = arith.constant 0 : index
    %c0_43 = arith.constant 0 : index
    %c0_44 = arith.constant 0 : index
    %89 = vector.load %arg5[%c0_42, %c0_43, %c0_44] : memref<1x8x128xf32, #tpu.memory_space<vmem>>, vector<1x8x128xf32>
    %90 = vector.shape_cast %89 : vector<1x8x128xf32> to vector<8x128xf32>
    %91 = vector.shape_cast %88 : vector<8x128xf32> to vector<1x8x128xf32>
    tpu.vector_store %arg5[%c0_42, %c0_43, %c0_44], %91 {strides = array<i32>} : memref<1x8x128xf32, #tpu.memory_space<vmem>>, vector<1x8x128xf32>,
    %c0_45 = arith.constant 0 : index
    %c0_46 = arith.constant 0 : index
    %c0_47 = arith.constant 0 : index
    %92 = vector.load %arg6[%c0_45, %c0_46, %c0_47] : memref<1x8x128xf32, #tpu.memory_space<vmem>>, vector<1x8x128xf32>
    %93 = vector.shape_cast %92 : vector<1x8x128xf32> to vector<8x128xf32>
    %94 = arith.addf %93, %82 : vector<8x128xf32>
    %c0_48 = arith.constant 0 : index
    %c0_49 = arith.constant 0 : index
    %c0_50 = arith.constant 0 : index
    %95 = vector.load %arg6[%c0_48, %c0_49, %c0_50] : memref<1x8x128xf32, #tpu.memory_space<vmem>>, vector<1x8x128xf32>
    %96 = vector.shape_cast %95 : vector<1x8x128xf32> to vector<8x128xf32>
    %97 = vector.shape_cast %94 : vector<8x128xf32> to vector<1x8x128xf32>
    tpu.vector_store %arg6[%c0_48, %c0_49, %c0_50], %97 {strides = array<i32>} : memref<1x8x128xf32, #tpu.memory_space<vmem>>, vector<1x8x128xf32>,
    return
  }
  func.func @transform_0(%arg0: i32, %arg1: i32) -> i32 {
    %c0_i32 = arith.constant 0 : i32
    %c0_i32_0 = arith.constant 0 : i32
    return %c0_i32 : i32
  }
  func.func @transform_1(%arg0: i32, %arg1: i32) -> (i32, i32, i32, i32) {
    %c0_i32 = arith.constant 0 : i32
    %c0_i32_0 = arith.constant 0 : i32
    %c0_i32_1 = arith.constant 0 : i32
    return %arg0, %c0_i32, %arg1, %c0_i32_0 : i32, i32, i32, i32
  }
  func.func @transform_2(%arg0: i32, %arg1: i32) -> (i32, i32, i32) {
    %c0_i32 = arith.constant 0 : i32
    %c0_i32_0 = arith.constant 0 : i32
    return %arg0, %arg1, %c0_i32 : i32, i32, i32
  }
  func.func @transform_3(%arg0: i32, %arg1: i32) -> (i32, i32, i32) {
    %c0_i32 = arith.constant 0 : i32
    %c0_i32_0 = arith.constant 0 : i32
    %c0_i32_1 = arith.constant 0 : i32
    return %arg0, %c0_i32, %c0_i32_0 : i32, i32, i32
  }
  func.func @transform_4(%arg0: i32, %arg1: i32) -> (i32, i32, i32) {
    %c0_i32 = arith.constant 0 : i32
    %c0_i32_0 = arith.constant 0 : i32
    %c0_i32_1 = arith.constant 0 : i32
    return %arg0, %c0_i32, %c0_i32_0 : i32, i32, i32
  }
}

</mosaic_0001>

<llo_original>
// kernel: pixelwise_cross_entropy_loss.1
$region0: #{pixelwise_cross_entropy_loss.1}
  #allocation0 [shape = 'u32[]', space=smem, size = 0x4, offset = 0x4, fixed_abs, tag = 'smem constant byte address 0x4 - core index']
  #allocation1 [shape = 'u32[72,128]{1,0:T(1,128)}', space=vmem, size = 0x9000, scoped, tag = 'internal scratch']
  %s0 = inlined_call_operand.vmem [shape: f32[4], index: 0, kind: input, shape index: {}]
  %s1 = inlined_call_operand.vmem [shape: f32[2,4,8,128], index: 1, kind: input, shape index: {}]
  %s2 = inlined_call_operand.vmem [shape: s32[2,8,128], index: 2, kind: input, shape index: {}]
  %s3 = inlined_call_operand.vmem [shape: f32[2,8,128], index: 3, kind: output, shape index: {0}]
  %s4 = inlined_call_operand.vmem [shape: f32[2,8,128], index: 4, kind: output, shape index: {1}]
  %5 = xla_tuple %s3, %s4
  %s6 = sld [smem:[#allocation0]]
  $region61: #{pixelwise_cross_entropy_loss.1} parent=0
    _
  %s8 = ssub.s32 1, %s6
  %s9 = scalar_select 0, %s8, %s6
  $region1: #{pixelwise_cross_entropy_loss.1} parent=0
    #allocation2 [shape = 'u8[512]{0}', space=smem, size = 0x200, scoped, tag = 'input window, operand 0, single buffered']
    #allocation3 [shape = 's32[2]{0}', space=sflag, size = 0x8, scoped, tag = 'scoped memory for pixelwise_cross_entropy_loss.1']
    %10 = vsyncpa [#allocation3], 0
    loop: start=0, step=1, limit=4
    $region2: #{pixelwise_cross_entropy_loss.1} parent=1 // loop_pre_header
      _
    $region3: #{pixelwise_cross_entropy_loss.1} parent=1 // loop_header
      %s12 = sphi 0, %s16
      %p13 = scmp.ge.s32.totalorder %s12, 4
      %s19 = sphi 0, %s31
      %s20 = sphi 0, %s27
      %s21 = sphi 0, %s19
      %s22 = sphi 0, %s20
      %s23 = sphi 0, %s21
      %s24 = sphi 0, %s22
      %s32 = sphi 0, %s32
      %s34 = sphi 0, %s32
      %s35 = sphi 0, %s34
      %s49 = sphi 0, %s35
      %s57 = sphi 0, %s59
      %s60 = sphi 0, %s57
      %s61 = sphi 0, %s60
      %s77 = sphi 0, %s61
      %s85 = sphi 0, %s87
      %s88 = sphi 0, %s85
      %s89 = sphi 0, %s88
      %s105 = sphi 0, %s89
      %s111 = sphi 0, %s113
      %s114 = sphi 0, %s111
      %s115 = sphi 0, %s114
      %s131 = sphi 0, %s115
      %s137 = sphi 0, %s139
      %s140 = sphi 0, %s137
      %s141 = sphi 0, %s140
      %s157 = sphi 0, %s141
    $region4: #{pixelwise_cross_entropy_loss.1} parent=1 // loop_header_branch
      %15 = sbr.rel (%p13) target = $region8
    $region5: #{pixelwise_cross_entropy_loss.1} parent=1 // loop_body
      %s17 = ssub.s32 %s12, 1
      %s18 = ssub.s32 %s12, 2
      %s25 = sadd.s32 1, %s20
      %p26 = scmp.ge.s32.totalorder %s25, 1
      %s27 = scalar_select %p26, 0, %s25
      %s28 = sadd.s32 1, %s19
      %s29 = scalar_select %p26, %s28, %s19
      %p30 = scmp.ge.s32.totalorder %s29, 2
      %s31 = scalar_select %p30, 0, %s29
      %s33 = sadd.s32 %s32, 1
      %p36 = scmp.eq.s32.totalorder %s12, 1
      %p37 = scmp.ne.s32.totalorder %s32, %s34
      %p38 = scmp.eq.s32.totalorder %s12, 0
      %p39 = por %p37, %p38
      %p40 = scmp.ne.s32.totalorder %s32, %s34
      %p41 = scmp.eq.s32.totalorder %s17, 1
      %p42 = por %p40, %p41
      %p43 = scmp.ne.s32.totalorder %s34, %s35
      %p44 = scmp.eq.s32.totalorder %s17, 0
      %p45 = por %p43, %p44
      %p46 = scmp.ne.s32.totalorder %s34, %s35
      %p47 = scmp.eq.s32.totalorder %s18, 1
      %p48 = por %p46, %p47
      %p50 = scmp.ne.s32.totalorder %s35, %s49
      %p51 = scmp.eq.s32.totalorder %s18, 0
      %p52 = por %p50, %p51
      %s53 = ssub.s32 %s19, %s31
      %s54 = ssub.s32 %s20, %s27
      %s55 = sor.u32 %s53, %s54
      %p56 = scmp.eq.s32.totalorder %s55, 0
      %s58 = sadd.s32 %s57, 1
      %s59 = scalar_select %p56, %s57, %s58
      %p62 = pneg %p56
      %p63 = scmp.eq.s32.totalorder %s12, 1
      %p64 = por %p62, %p63
      %p65 = scmp.ne.s32.totalorder %s57, %s60
      %p66 = scmp.eq.s32.totalorder %s12, 0
      %p67 = por %p65, %p66
      %p68 = scmp.ne.s32.totalorder %s57, %s60
      %p69 = scmp.eq.s32.totalorder %s17, 1
      %p70 = por %p68, %p69
      %p71 = scmp.ne.s32.totalorder %s60, %s61
      %p72 = scmp.eq.s32.totalorder %s17, 0
      %p73 = por %p71, %p72
      %p74 = scmp.ne.s32.totalorder %s60, %s61
      %p75 = scmp.eq.s32.totalorder %s18, 1
      %p76 = por %p74, %p75
      %p78 = scmp.ne.s32.totalorder %s61, %s77
      %p79 = scmp.eq.s32.totalorder %s18, 0
      %p80 = por %p78, %p79
      %s81 = ssub.s32 %s19, %s31
      %s82 = ssub.s32 %s20, %s27
      %s83 = sor.u32 %s81, %s82
      %p84 = scmp.eq.s32.totalorder %s83, 0
      %s86 = sadd.s32 %s85, 1
      %s87 = scalar_select %p84, %s85, %s86
      %p90 = pneg %p84
      %p91 = scmp.eq.s32.totalorder %s12, 1
      %p92 = por %p90, %p91
      %p93 = scmp.ne.s32.totalorder %s85, %s88
      %p94 = scmp.eq.s32.totalorder %s12, 0
      %p95 = por %p93, %p94
      %p96 = scmp.ne.s32.totalorder %s85, %s88
      %p97 = scmp.eq.s32.totalorder %s17, 1
      %p98 = por %p96, %p97
      %p99 = scmp.ne.s32.totalorder %s88, %s89
      %p100 = scmp.eq.s32.totalorder %s17, 0
      %p101 = por %p99, %p100
      %p102 = scmp.ne.s32.totalorder %s88, %s89
      %p103 = scmp.eq.s32.totalorder %s18, 1
      %p104 = por %p102, %p103
      %p106 = scmp.ne.s32.totalorder %s89, %s105
      %p107 = scmp.eq.s32.totalorder %s18, 0
      %p108 = por %p106, %p107
      %s109 = ssub.s32 %s19, %s31
      %p110 = scmp.eq.s32.totalorder %s109, 0
      %s112 = sadd.s32 %s111, 1
      %s113 = scalar_select %p110, %s111, %s112
      %p116 = pneg %p110
      %p117 = scmp.eq.s32.totalorder %s12, 1
      %p118 = por %p116, %p117
      %p119 = scmp.ne.s32.totalorder %s111, %s114
      %p120 = scmp.eq.s32.totalorder %s12, 0
      %p121 = por %p119, %p120
      %p122 = scmp.ne.s32.totalorder %s111, %s114
      %p123 = scmp.eq.s32.totalorder %s17, 1
      %p124 = por %p122, %p123
      %p125 = scmp.ne.s32.totalorder %s114, %s115
      %p126 = scmp.eq.s32.totalorder %s17, 0
      %p127 = por %p125, %p126
      %p128 = scmp.ne.s32.totalorder %s114, %s115
      %p129 = scmp.eq.s32.totalorder %s18, 1
      %p130 = por %p128, %p129
      %p132 = scmp.ne.s32.totalorder %s115, %s131
      %p133 = scmp.eq.s32.totalorder %s18, 0
      %p134 = por %p132, %p133
      %s135 = ssub.s32 %s19, %s31
      %p136 = scmp.eq.s32.totalorder %s135, 0
      %s138 = sadd.s32 %s137, 1
      %s139 = scalar_select %p136, %s137, %s138
      %p142 = pneg %p136
      %p143 = scmp.eq.s32.totalorder %s12, 1
      %p144 = por %p142, %p143
      %p145 = scmp.ne.s32.totalorder %s137, %s140
      %p146 = scmp.eq.s32.totalorder %s12, 0
      %p147 = por %p145, %p146
      %p148 = scmp.ne.s32.totalorder %s137, %s140
      %p149 = scmp.eq.s32.totalorder %s17, 1
      %p150 = por %p148, %p149
      %p151 = scmp.ne.s32.totalorder %s140, %s141
      %p152 = scmp.eq.s32.totalorder %s17, 0
      %p153 = por %p151, %p152
      %p154 = scmp.ne.s32.totalorder %s140, %s141
      %p155 = scmp.eq.s32.totalorder %s18, 1
      %p156 = por %p154, %p155
      %p158 = scmp.ne.s32.totalorder %s141, %s157
      %p159 = scmp.eq.s32.totalorder %s18, 0
      %p160 = por %p158, %p159
      %p161 = scmp.le.s32.totalorder 1, %s12
      %p162 = scmp.lt.s32.totalorder %s12, 3
      %p163 = pnand %p161, %p162
      %p164 = pneg %p163
      // Predicated region
      $region9: #{pixelwise_cross_entropy_loss.1} parent=5 // pred_check
        _
      $region10: #{pixelwise_cross_entropy_loss.1} parent=5 // pred_check_branch
        %166 = sbr.rel (%p163) target = $region12
      $region11: #{pixelwise_cross_entropy_loss.1} parent=5 // pred_region
        %s167 = ssub.s32 %s12, 1
        // Predicated region
        $region13: #{pixelwise_cross_entropy_loss.1} parent=11 // pred_check
          %p168 = pneg %p45
        $region14: #{pixelwise_cross_entropy_loss.1} parent=11 // pred_check_branch
          %170 = sbr.rel (%p168) target = $region16
        $region15: #{pixelwise_cross_entropy_loss.1} parent=11 // pred_region
          %172 = vsyncadd [#allocation3], 0
          %s174 = sshll.u32 %s0, 4
          %s175 = int_to_ptr.vmem [resolvable:$true] %s174
          %177 = dma.vmem_to_smem %s175, 16, [#allocation2], [#allocation3]
        $region16: #{pixelwise_cross_entropy_loss.1} parent=11 // pred_fallthru
          _
      $region12: #{pixelwise_cross_entropy_loss.1} parent=5 // pred_fallthru
        _
      %p178 = scmp.lt.s32.totalorder %s12, 2
      // Predicated region
      $region17: #{pixelwise_cross_entropy_loss.1} parent=5 // pred_check
        %p179 = pneg %p178
      $region18: #{pixelwise_cross_entropy_loss.1} parent=5 // pred_check_branch
        %181 = sbr.rel (%p179) target = $region20
      $region19: #{pixelwise_cross_entropy_loss.1} parent=5 // pred_region
        // Predicated region
        $region21: #{pixelwise_cross_entropy_loss.1} parent=19 // pred_check
          %p182 = pneg %p67
        $region22: #{pixelwise_cross_entropy_loss.1} parent=19 // pred_check_branch
          %184 = sbr.rel (%p182) target = $region24
        $region23: #{pixelwise_cross_entropy_loss.1} parent=19 // pred_region
          %p185 = scmp.lt.s32.totalorder %s19, 1
          %s186 = scalar_select %p185, %s19, 1
          %p187 = scmp.lt.s32.totalorder %s20, 0
          %s188 = scalar_select %p187, %s20, 0
          %s189 = smul.addr %s186, 4
          %s190 = sadd.s32 %s188, %s189
          %s191 = smul.addr %s190, 8
          %s192 = scalar_lea.vmem %s1, %s191
        $region24: #{pixelwise_cross_entropy_loss.1} parent=19 // pred_fallthru
          _
        // Predicated region
        $region25: #{pixelwise_cross_entropy_loss.1} parent=19 // pred_check
          %p193 = pneg %p95
        $region26: #{pixelwise_cross_entropy_loss.1} parent=19 // pred_check_branch
          %195 = sbr.rel (%p193) target = $region28
        $region27: #{pixelwise_cross_entropy_loss.1} parent=19 // pred_region
          %p196 = scmp.lt.s32.totalorder %s19, 1
          %s197 = scalar_select %p196, %s19, 1
          %p198 = scmp.lt.s32.totalorder %s20, 0
          %s199 = scalar_select %p198, %s20, 0
          %s200 = sadd.s32 %s199, %s197
          %s201 = smul.addr %s200, 8
          %s202 = scalar_lea.vmem %s2, %s201
        $region28: #{pixelwise_cross_entropy_loss.1} parent=19 // pred_fallthru
          _
      $region20: #{pixelwise_cross_entropy_loss.1} parent=5 // pred_fallthru
        _
      %p203 = scmp.le.s32.totalorder 1, %s12
      %p204 = scmp.lt.s32.totalorder %s12, 3
      %p205 = pnand %p203, %p204
      %p206 = pneg %p205
      // Predicated region
      $region29: #{pixelwise_cross_entropy_loss.1} parent=5 // pred_check
        _
      $region30: #{pixelwise_cross_entropy_loss.1} parent=5 // pred_check_branch
        %208 = sbr.rel (%p205) target = $region32
      $region31: #{pixelwise_cross_entropy_loss.1} parent=5 // pred_region
        %s209 = ssub.s32 %s12, 1
        // Predicated region
        $region33: #{pixelwise_cross_entropy_loss.1} parent=31 // pred_check
          %p210 = pneg %p45
        $region34: #{pixelwise_cross_entropy_loss.1} parent=31 // pred_check_branch
          %212 = sbr.rel (%p210) target = $region36
        $region35: #{pixelwise_cross_entropy_loss.1} parent=31 // pred_region
          %214 = dma.done [#allocation3], 16
        $region36: #{pixelwise_cross_entropy_loss.1} parent=31 // pred_fallthru
          _
        %215 = sfence
        %p216 = pneg %p45
        %p217 = pneg %p42
        %p218 = scmp.lt.s32.totalorder %s21, 1
        %s219 = scalar_select %p218, %s21, 1
        %p220 = scmp.lt.s32.totalorder %s22, 0
        %s221 = scalar_select %p220, %s22, 0
        %s222 = smul.addr %s219, 4
        %s223 = sadd.s32 %s221, %s222
        %s224 = smul.addr %s223, 8
        %s225 = scalar_lea.vmem %s1, %s224
        %p226 = pneg %p73
        %p227 = pneg %p70
        %p228 = scmp.lt.s32.totalorder %s21, 1
        %s229 = scalar_select %p228, %s21, 1
        %p230 = scmp.lt.s32.totalorder %s22, 0
        %s231 = scalar_select %p230, %s22, 0
        %s232 = sadd.s32 %s231, %s229
        %s233 = smul.addr %s232, 8
        %s234 = scalar_lea.vmem %s2, %s233
        %p235 = pneg %p101
        %p236 = pneg %p98
        %p237 = pneg %p127
        %p238 = pneg %p124
        %p239 = scmp.lt.s32.totalorder %s21, 1
        %s240 = scalar_select %p239, %s21, 1
        %s241 = smul.addr %s240, 8
        %s242 = scalar_lea.vmem %s3, %s241
        %p243 = pneg %p153
        %p244 = pneg %p150
        %p245 = scmp.lt.s32.totalorder %s21, 1
        %s246 = scalar_select %p245, %s21, 1
        %s247 = smul.addr %s246, 8
        %s248 = scalar_lea.vmem %s4, %s247
        %p249 = scmp.lt.s32.totalorder %s21, 1
        %s250 = scalar_select %p249, %s21, 1
        %p251 = scmp.lt.s32.totalorder %s22, 0
        %s252 = scalar_select %p251, %s22, 0
        %s253 = smul.addr %s250, 4
        %s254 = sadd.s32 %s252, %s253
        %s255 = smul.addr %s254, 8
        %s256 = scalar_lea.vmem %s1, %s255
        %p257 = scmp.lt.s32.totalorder %s21, 1
        %s258 = scalar_select %p257, %s21, 1
        %p259 = scmp.lt.s32.totalorder %s22, 0
        %s260 = scalar_select %p259, %s22, 0
        %s261 = sadd.s32 %s260, %s258
        %s262 = smul.addr %s261, 8
        %s263 = scalar_lea.vmem %s2, %s262
        %p264 = scmp.lt.s32.totalorder %s21, 1
        %s265 = scalar_select %p264, %s21, 1
        %s266 = smul.addr %s265, 8
        %s267 = scalar_lea.vmem %s3, %s266
        %p268 = scmp.lt.s32.totalorder %s21, 1
        %s269 = scalar_select %p268, %s21, 1
        %s270 = smul.addr %s269, 8
        %s271 = scalar_lea.vmem %s4, %s270
        %p272 = scmp.eq.s32.totalorder %s22, 0
        // Predicated region
        $region37: #{pixelwise_cross_entropy_loss.1} parent=31 // pred_check
          %p273 = pneg %p272
        $region38: #{pixelwise_cross_entropy_loss.1} parent=31 // pred_check_branch
          %275 = sbr.rel (%p273) target = $region40
        $region39: #{pixelwise_cross_entropy_loss.1} parent=31 // pred_region
          %276 = vst [vmem:[%s267] sm:$0xff] 0.0
          %277 = vst [vmem:[%s271] sm:$0xff] 0.0
        $region40: #{pixelwise_cross_entropy_loss.1} parent=31 // pred_fallthru
          _
        %v278 = vld [vmem:[%s263] sm:$0xff]
        %v279 = vld [vmem:[%s256] sm:$0xff]
        %s280 = scalar_lea.vmem %s256, 8
        %v281 = vld [vmem:[%s280] sm:$0xff]
        %v282 = vmax.f32 %v279, %v281
        %s283 = scalar_lea.vmem %s256, 16
        %v284 = vld [vmem:[%s283] sm:$0xff]
        %v285 = vmax.f32 %v282, %v284
        %s286 = scalar_lea.vmem %s256, 24
        %v287 = vld [vmem:[%s286] sm:$0xff]
        %v288 = vmax.f32 %v285, %v287
        %v289 = vsub.f32 %v279, %v288
        %v290 = vmul.f32 %v289, 1.442695
        %v291 = vpow.pop %v290
        %v292 = vadd.f32 %v291, 0.0
        %vm293 = vcmp.eq.s32.totalorder %v278, 0
        %v294 = vsel %vm293, 1, 0
        %v295 = vcvt.s32.f32 %v294
        %v296 = vmul.f32 %v295, %v289
        %v297 = vadd.f32 %v296, 0.0
        %s298 = sld [smem:[#allocation2]]
        %v299 = vstv %s298
        %v300 = vmul.f32 %v295, %v299
        %v301 = vadd.f32 %v300, 0.0
        %v302 = vsub.f32 %v281, %v288
        %v303 = vmul.f32 %v302, 1.442695
        %v304 = vpow.pop %v303
        %v305 = vadd.f32 %v292, %v304
        %vm306 = vcmp.eq.s32.totalorder %v278, 1
        %v307 = vsel %vm306, 1, 0
        %v308 = vcvt.s32.f32 %v307
        %v309 = vmul.f32 %v308, %v302
        %v310 = vadd.f32 %v297, %v309
        %s311 = sld [smem:[#allocation2 + $0x1]]
        %v312 = vstv %s311
        %v313 = vmul.f32 %v308, %v312
        %v314 = vadd.f32 %v301, %v313
        %v315 = vsub.f32 %v284, %v288
        %v316 = vmul.f32 %v315, 1.442695
        %v317 = vpow.pop %v316
        %v318 = vadd.f32 %v305, %v317
        %vm319 = vcmp.eq.s32.totalorder %v278, 2
        %v320 = vsel %vm319, 1, 0
        %v321 = vcvt.s32.f32 %v320
        %v322 = vmul.f32 %v321, %v315
        %v323 = vadd.f32 %v310, %v322
        %s324 = sld [smem:[#allocation2 + $0x2]]
        %v325 = vstv %s324
        %v326 = vmul.f32 %v321, %v325
        %v327 = vadd.f32 %v314, %v326
        %v328 = vsub.f32 %v287, %v288
        %v329 = vmul.f32 %v328, 1.442695
        %v330 = vpow.pop %v329
        %v331 = vadd.f32 %v318, %v330
        %vm332 = vcmp.eq.s32.totalorder %v278, 3
        %v333 = vsel %vm332, 1, 0
        %v334 = vcvt.s32.f32 %v333
        %v335 = vmul.f32 %v334, %v328
        %v336 = vadd.f32 %v323, %v335
        %s337 = sld [smem:[#allocation2 + $0x3]]
        %v338 = vstv %s337
        %v339 = vmul.f32 %v334, %v338
        %v340 = vadd.f32 %v327, %v339
        %v341 = vlog2.pop %v331
        %v342 = vmul.f32 %v341, 0.6931472
        %v343 = vsub.f32 %v342, %v336
        %v344 = vmul.f32 %v340, %v343
        %v345 = vld [vmem:[%s267] sm:$0xff]
        %v346 = vadd.f32 %v345, %v344
        %347 = vst [vmem:[%s267] sm:$0xff] %v346
        %v348 = vld [vmem:[%s271] sm:$0xff]
        %v349 = vadd.f32 %v348, %v340
        %350 = vst [vmem:[%s271] sm:$0xff] %v349
        %p351 = scmp.lt.s32.totalorder %s21, 1
        %s352 = scalar_select %p351, %s21, 1
        %s353 = smul.addr %s352, 8
        %s354 = scalar_lea.vmem %s3, %s353
        %p355 = scmp.lt.s32.totalorder %s21, 1
        %s356 = scalar_select %p355, %s21, 1
        %s357 = smul.addr %s356, 8
        %s358 = scalar_lea.vmem %s4, %s357
        // Predicated region
        $region41: #{pixelwise_cross_entropy_loss.1} parent=31 // pred_check
          %p359 = pneg %p124
        $region42: #{pixelwise_cross_entropy_loss.1} parent=31 // pred_check_branch
          %361 = sbr.rel (%p359) target = $region44
        $region43: #{pixelwise_cross_entropy_loss.1} parent=31 // pred_region
          _
        $region44: #{pixelwise_cross_entropy_loss.1} parent=31 // pred_fallthru
          _
        // Predicated region
        $region45: #{pixelwise_cross_entropy_loss.1} parent=31 // pred_check
          %p362 = pneg %p150
        $region46: #{pixelwise_cross_entropy_loss.1} parent=31 // pred_check_branch
          %364 = sbr.rel (%p362) target = $region48
        $region47: #{pixelwise_cross_entropy_loss.1} parent=31 // pred_region
          _
        $region48: #{pixelwise_cross_entropy_loss.1} parent=31 // pred_fallthru
          _
      $region32: #{pixelwise_cross_entropy_loss.1} parent=5 // pred_fallthru
        _
      %p365 = scmp.le.s32.totalorder 2, %s12
      // Predicated region
      $region49: #{pixelwise_cross_entropy_loss.1} parent=5 // pred_check
        %p366 = pneg %p365
      $region50: #{pixelwise_cross_entropy_loss.1} parent=5 // pred_check_branch
        %368 = sbr.rel (%p366) target = $region52
      $region51: #{pixelwise_cross_entropy_loss.1} parent=5 // pred_region
        %s369 = ssub.s32 %s12, 2
        // Predicated region
        $region53: #{pixelwise_cross_entropy_loss.1} parent=51 // pred_check
          %p370 = pneg %p130
        $region54: #{pixelwise_cross_entropy_loss.1} parent=51 // pred_check_branch
          %372 = sbr.rel (%p370) target = $region56
        $region55: #{pixelwise_cross_entropy_loss.1} parent=51 // pred_region
          %p373 = scmp.lt.s32.totalorder %s23, 1
          %s374 = scalar_select %p373, %s23, 1
          %s375 = smul.addr %s374, 8
          %s376 = scalar_lea.vmem %s3, %s375
        $region56: #{pixelwise_cross_entropy_loss.1} parent=51 // pred_fallthru
          _
        // Predicated region
        $region57: #{pixelwise_cross_entropy_loss.1} parent=51 // pred_check
          %p377 = pneg %p156
        $region58: #{pixelwise_cross_entropy_loss.1} parent=51 // pred_check_branch
          %379 = sbr.rel (%p377) target = $region60
        $region59: #{pixelwise_cross_entropy_loss.1} parent=51 // pred_region
          %p380 = scmp.lt.s32.totalorder %s23, 1
          %s381 = scalar_select %p380, %s23, 1
          %s382 = smul.addr %s381, 8
          %s383 = scalar_lea.vmem %s4, %s382
        $region60: #{pixelwise_cross_entropy_loss.1} parent=51 // pred_fallthru
          _
      $region52: #{pixelwise_cross_entropy_loss.1} parent=5 // pred_fallthru
        _
    $region6: #{pixelwise_cross_entropy_loss.1} parent=1 // loop_footer
      %s16 = sadd.s32 1, %s12
    $region7: #{pixelwise_cross_entropy_loss.1} parent=1 // loop_footer_branch
      %11 = sbr.rel target = $region3
    $region8: #{pixelwise_cross_entropy_loss.1} parent=1 // loop_exit
      _
    %384 = vsyncpa [#allocation3], 1
    %s385 = scalar_lea.sflag [#allocation3], 1
    %386 = vsyncpa %s385, 1

</llo_original>
